<compile_context>
chip_gen: v7x
topology: tpu7x:2x2x1
jax: 0.10.0
libtpu: 0.0.40
codegen_flags: <defaults>
</compile_context>

<pallas_src>
import math

import jax
import jax.numpy as jnp
from jax.experimental import pallas as pl
from jax.experimental.pallas import tpu as pltpu


def _needs_f32_upcast(itemsize: int) -> bool:
    """Up-cast sub-32-bit float compute to f32 only on chips without bf16 VPU/EUP."""
    if itemsize >= 4:
        return False
    try:
        kind = jax.devices()[0].device_kind.lower()
    except Exception:
        return True  # unknown device: f32 compute lowers everywhere, safe default
    return any(tag in kind for tag in ("v2", "v3", "v4", "v5"))


def _make_kernel(log_base: float, compute_dtype):
    use_mul = (log_base != 1.0)  # base == e -> skip the multiply entirely

    def _exp_constrain_kernel(x_ref, o_ref):
        x = x_ref[...]
        if compute_dtype is not None and x.dtype != compute_dtype:
            x = x.astype(compute_dtype)
        if use_mul:
            x = x * jnp.asarray(log_base, dtype=x.dtype)
        o_ref[...] = jnp.exp(x).astype(o_ref.dtype)

    return _exp_constrain_kernel


def exp_constrain(x: jax.Array, *, base: float = math.e,
                  target_block_bytes: int = 4 * 1024 * 1024) -> jax.Array:
    """Elementwise ExpConstrain forward: exp(x * log(base)). Works on any shape."""
    log_base = math.log(base)
    orig_shape = x.shape

    # torch.exp promotes integer inputs to floating point; mirror that here.
    if not jnp.issubdtype(x.dtype, jnp.floating):
        x = x.astype(jnp.float32)
    dtype = x.dtype
    itemsize = dtype.itemsize

    n = x.size
    if n == 0:
        return x.reshape(orig_shape)

    flat = x.reshape(-1)  # free (bitcast) for contiguous row-major inputs

    if n % 128 != 0:
        # Ragged element count: a single fused XLA elementwise op is already at the
        # HBM roofline (read n, write n) and avoids any slice/pad/concat repacking
        # that would double HBM traffic. Ragged totals are rare for NN tensors.
        y = jnp.exp(flat * log_base).astype(dtype)
        return y.reshape(orig_shape)

    # Minimum sublane tile per dtype: 8 (4-byte), 16 (2-byte), 32 (1-byte).
    min_sub = {4: 8, 2: 16, 1: 32}.get(itemsize, 8)

    # Widest lane count dividing n that still yields >= min_sub rows; otherwise 128.
    lanes = 128
    for w in (1024, 512, 256):
        if n % w == 0 and (n // w) >= min_sub:
            lanes = w
            break
    rows = n // lanes
    x2d = flat.reshape(rows, lanes)  # free reshape (n is a multiple of lanes)

    if rows <= min_sub:
        tr = rows  # full-extent sublane block: always legal, single step
    else:
        # ~target_block_bytes per block, multiple of min_sub, never exceeding rows.
        tr = max(min_sub, (target_block_bytes // (lanes * itemsize)) // min_sub * min_sub)
        tr = min(tr, (rows // min_sub) * min_sub)
        if rows >= 2 * min_sub:
            # Guarantee >= 2 grid steps so v7x's second TensorCore gets work.
            half = (((rows + 1) // 2) + min_sub - 1) // min_sub * min_sub
            tr = min(tr, half)
    grid = (pl.cdiv(rows, tr),)

    block_bytes = tr * lanes * itemsize
    # in + out, each double-buffered, plus headroom. Safe on v5e (128 MiB phys,
    # 16 MiB scoped default raised here) and inside v7x's 64 MiB physical VMEM.
    vmem_limit = max(16 * 1024 * 1024, 4 * block_bytes + 4 * 1024 * 1024)

    compute_dtype = jnp.float32 if _needs_f32_upcast(itemsize) else None

    out2d = pl.pallas_call(
        _make_kernel(log_base, compute_dtype),
        out_shape=jax.ShapeDtypeStruct((rows, lanes), dtype),
        grid=grid,
        in_specs=[pl.BlockSpec((tr, lanes), lambda i: (i, 0))],
        out_specs=pl.BlockSpec((tr, lanes), lambda i: (i, 0)),
        compiler_params=pltpu.CompilerParams(
            dimension_semantics=("parallel",),
            vmem_limit_bytes=vmem_limit,
        ),
        cost_estimate=pl.CostEstimate(
            flops=n,
            transcendentals=n,
            bytes_accessed=2 * n * itemsize,
        ),
    )(x2d)

    return out2d.reshape(orig_shape)


def exp_constrain_ref(x: jax.Array, *, base: float = math.e) -> jax.Array:
    """Pure-JAX reference matching the PyTorch ExpConstrain.forward semantics."""
    return jnp.exp(x * math.log(base)).astype(x.dtype)


if __name__ == "__main__":
    key = jax.random.PRNGKey(0)
    k1, k2, k3, k4 = jax.random.split(key, 4)

    # Small NCHW input consistent with a conv-style parameter/activation tensor.
    x1 = jax.random.normal(k1, (2, 4, 16, 16), dtype=jnp.float32)
    # Larger slab exercising the multi-block (grid >= 2) path and the 2-step cap.
    x2 = jax.random.normal(k2, (2, 8, 128, 128), dtype=jnp.float32)
    # Ragged element count exercising the fused-XLA ragged fallback.
    x3 = jax.random.normal(k3, (3, 5, 7, 11), dtype=jnp.float32)

    for x in (x1, x2, x3):
        y = jax.block_until_ready(exp_constrain(x))
        y_ref = exp_constrain_ref(x)
        assert y.shape == x.shape and y.dtype == x.dtype
        assert jnp.allclose(y, y_ref, rtol=2e-5, atol=1e-6), "mismatch vs reference"

    # bf16 path: native bf16 compute on v6e/v7x, f32 compute on older chips.
    x4 = jax.random.normal(k4, (2, 4, 16, 16), dtype=jnp.bfloat16)
    y4 = jax.block_until_ready(exp_constrain(x4))
    assert y4.shape == x4.shape and y4.dtype == x4.dtype
    y4_ref = jnp.exp(x4.astype(jnp.float32))
    assert jnp.allclose(y4.astype(jnp.float32), y4_ref, rtol=5e-2, atol=5e-2)

    print("KERNEL_OK")
</pallas_src>

<mosaic_0001>
module attributes {stable_mosaic.version = 11 : i64} {
  func.func @_exp_constrain_kernel(%arg0: i32, %arg1: memref<8x256xf32, #tpu.memory_space<vmem>>, %arg2: memref<8x256xf32, #tpu.memory_space<vmem>>) attributes {dimension_semantics = [#tpu.dimension_semantics<parallel>], iteration_bounds = array<i64: 1>, scalar_prefetch = 0 : i64, scratch_operands = 0 : i64, tpu.core_type = #tpu.core_type<tc>, window_params = [{transform_indices = @transform_0, window_bounds = array<i64: 8, 256>}, {transform_indices = @transform_1, window_bounds = array<i64: 8, 256>}]} {
    %c0 = arith.constant 0 : index
    %c0_0 = arith.constant 0 : index
    %0 = vector.load %arg1[%c0, %c0_0] : memref<8x256xf32, #tpu.memory_space<vmem>>, vector<8x256xf32>
    %1 = math.exp %0 : vector<8x256xf32>
    %c0_1 = arith.constant 0 : index
    %c0_2 = arith.constant 0 : index
    %2 = vector.load %arg2[%c0_1, %c0_2] : memref<8x256xf32, #tpu.memory_space<vmem>>, vector<8x256xf32>
    tpu.vector_store %arg2[%c0_1, %c0_2], %1 {strides = array<i32>} : memref<8x256xf32, #tpu.memory_space<vmem>>, vector<8x256xf32>,
    return
  }
  func.func @transform_0(%arg0: i32) -> (i32, i32) {
    %c0_i32 = arith.constant 0 : i32
    %c0_i32_0 = arith.constant 0 : i32
    return %arg0, %c0_i32 : i32, i32
  }
  func.func @transform_1(%arg0: i32) -> (i32, i32) {
    %c0_i32 = arith.constant 0 : i32
    %c0_i32_0 = arith.constant 0 : i32
    return %arg0, %c0_i32 : i32, i32
  }
}

</mosaic_0001>

<llo_original>
// kernel: tpu_custom_call.1
$region0: #{tpu_custom_call.1}
  #allocation0 [shape = 'u32[]', space=smem, size = 0x4, offset = 0x4, fixed_abs, tag = 'smem constant byte address 0x4 - core index']
  #allocation1 [shape = 'u32[144,128]{1,0:T(1,128)}', space=vmem, size = 0x12000, scoped, tag = 'internal scratch']
  %s0 = inlined_call_operand.hbm [shape: f32[8,256], index: 0, kind: input, shape index: {}]
  %s1 = inlined_call_operand.hbm [shape: f32[8,256], index: 1, kind: output, shape index: {}]
  %s2 = sld [smem:[#allocation0]]
  $region18: #{tpu_custom_call.1} parent=0
    _
  %s4 = ssub.s32 1, %s2
  %s5 = scalar_select 0, %s4, %s2
  $region1: #{tpu_custom_call.1} parent=0
    #allocation2 [shape = 'u8[8192]{0}', space=vmem, size = 0x2000, scoped, tag = 'input window, operand 0, single buffered']
    #allocation3 [shape = 's32[1]{0}', space=sflag, size = 0x4, scoped, tag = 'scoped memory for tpu_custom_call.1']
    #allocation4 [shape = 's32[1]{0}', space=sflag, size = 0x4, scoped, tag = 'scoped memory for tpu_custom_call.1']
    #allocation5 [shape = 'u8[8192]{0}', space=vmem, size = 0x2000, scoped, tag = 'output window, operand 0, single buffered']
    %6 = vsyncpa [#allocation3], 0
    %7 = vsyncpa [#allocation4], 0
    // Predicated region
    $region2: #{tpu_custom_call.1} parent=1 // pred_check
      _
    $region3: #{tpu_custom_call.1} parent=1 // pred_check_branch
      %9 = sbr.rel (0) target = $region5
    $region4: #{tpu_custom_call.1} parent=1 // pred_region
      %s11 = ssub.s32 256, 256
      %12 = vsyncadd [#allocation3], %s11
      %s14 = sshll.u32 [#allocation2], 4
      %s15 = int_to_ptr.vmem [resolvable:$true] %s14
      %17 = dma.hbm_to_vmem [thread:$0]  %s0, 256, %s15, [#allocation3]
    $region5: #{tpu_custom_call.1} parent=1 // pred_fallthru
      _
    // Predicated region
    $region6: #{tpu_custom_call.1} parent=1 // pred_check
      _
    $region7: #{tpu_custom_call.1} parent=1 // pred_check_branch
      %19 = sbr.rel (0) target = $region9
    $region8: #{tpu_custom_call.1} parent=1 // pred_region
      %20 = dma.done [#allocation3], 256
    $region9: #{tpu_custom_call.1} parent=1 // pred_fallthru
      _
    %v21 = vld [vmem:[#allocation2] sm:$0xff]
    %v22 = vld [vmem:[#allocation2 + $0x8] sm:$0xff]
    %v23 = vmul.f32 %v21, 1.442695
    %v24 = vpow.pop %v23
    %v25 = vmul.f32 %v22, 1.442695
    %v26 = vpow.pop %v25
    %27 = vst [vmem:[#allocation5] sm:$0xff] %v24
    %28 = vst [vmem:[#allocation5 + $0x8] sm:$0xff] %v26
    // Predicated region
    $region10: #{tpu_custom_call.1} parent=1 // pred_check
      _
    $region11: #{tpu_custom_call.1} parent=1 // pred_check_branch
      %30 = sbr.rel (0) target = $region13
    $region12: #{tpu_custom_call.1} parent=1 // pred_region
      %s32 = ssub.s32 256, 256
      %33 = vsyncadd [#allocation4], %s32
      %s35 = sshll.u32 [#allocation5], 4
      %s36 = int_to_ptr.vmem [resolvable:$true] %s35
      %38 = dma.vmem_to_hbm [thread:$0]  %s36, 256, %s1, [#allocation4]
    $region13: #{tpu_custom_call.1} parent=1 // pred_fallthru
      _
    // Predicated region
    $region14: #{tpu_custom_call.1} parent=1 // pred_check
      _
    $region15: #{tpu_custom_call.1} parent=1 // pred_check_branch
      %40 = sbr.rel (0) target = $region17
    $region16: #{tpu_custom_call.1} parent=1 // pred_region
      %41 = dma.done [#allocation4], 256
    $region17: #{tpu_custom_call.1} parent=1 // pred_fallthru
      _
    %42 = vsyncpa [#allocation3], 1
    %43 = vsyncpa [#allocation4], 1

</llo_original>
